<compile_context>
chip_gen: v7x
topology: tpu7x:2x2x1
jax: 0.10.0
libtpu: 0.0.40
codegen_flags: <defaults>
</compile_context>

<pallas_src>
import functools

import jax
import jax.numpy as jnp
from jax.experimental import pallas as pl
from jax.experimental.pallas import tpu as pltpu

_VLANE = 128  # lane-dense width for the value head output


# ---------------------------------------------------------------------------
# Fused kernel
# ---------------------------------------------------------------------------
def _fused_kernel(
    x_ref, wp_ref, bp_ref, wlm_ref, blm_ref, wc_ref, bc_ref, ws_ref, bs_ref,
    logits_ref, value_ref,
    h_ref,
    *, tk, nk,
):
    # x_ref:   (tm, Hp)   bf16      wp_ref/wc_ref: (Hp, Hp) bf16 (resident)
    # bp_ref/bc_ref: (1, Hp) f32    wlm_ref: (tk, tn) bf16   blm_ref: (1, tn) f32
    # ws_ref: (Hp, 128) bf16        bs_ref: (1, 128) f32
    # logits_ref: (tm, tn) f32 (accumulated in place)   value_ref: (tm, 128) f32
    # h_ref: (nk, tm, tk) bf16 scratch (policy hidden, per K block)
    n_i = pl.program_id(1)
    k_i = pl.program_id(2)

    # Once per token tile (first N/K step): compute both backbones' hidden
    # states and the (cheap) value head; cache the policy hidden in VMEM.
    @pl.when(jnp.logical_and(n_i == 0, k_i == 0))
    def _backbone():
        x = x_ref[...]
        hp = jnp.tanh(
            jnp.dot(x, wp_ref[...], preferred_element_type=jnp.float32)
            + bp_ref[...]
        ).astype(h_ref.dtype)
        # Store per K block so later steps use h_ref[k_i] (a cheap leading-dim
        # view) instead of a lane-dim dynamic slice (relayout copy per step).
        for kb in range(nk):  # static trip count, unrolled at trace time
            h_ref[kb] = hp[:, kb * tk:(kb + 1) * tk]

        hc = jnp.tanh(
            jnp.dot(x, wc_ref[...], preferred_element_type=jnp.float32)
            + bc_ref[...]
        )
        v = (
            jnp.dot(hc.astype(ws_ref.dtype), ws_ref[...],
                    preferred_element_type=jnp.float32)
            + bs_ref[...]
        )
        value_ref[...] = v.astype(value_ref.dtype)

    # lm_head matmul, K-tiled, accumulated directly into the resident output.
    partial = jnp.dot(h_ref[k_i], wlm_ref[...],
                      preferred_element_type=jnp.float32)

    @pl.when(k_i == 0)
    def _init():
        logits_ref[...] = partial

    @pl.when(k_i != 0)
    def _accum():
        logits_ref[...] += partial

    # Add the bias exactly once, on the last K step.
    @pl.when(k_i == pl.num_programs(2) - 1)
    def _finish():
        logits_ref[...] += blm_ref[...]


# ---------------------------------------------------------------------------
# Helpers
# ---------------------------------------------------------------------------
def _round_up(x, m):
    return (x + m - 1) // m * m


def _pick_tile(dim, target, align):
    # Full-dim block if it already fits the target, else an aligned tile.
    if dim <= target:
        return dim
    return max(align, (target // align) * align)


def _pad2d(a, rows, cols):
    pr, pc = rows - a.shape[0], cols - a.shape[1]
    if pr or pc:
        a = jnp.pad(a, ((0, pr), (0, pc)))
    return a


def _vmem_budget_bytes():
    """Generation-aware VMEM budget (never request the full physical VMEM)."""
    cap = 64 * 1024 * 1024  # conservative default if query unavailable
    try:
        info = pltpu.get_tpu_info()
        cap = int(getattr(info, "vmem_capacity_bytes", cap))
    except Exception:
        pass
    if cap <= 64 * 1024 * 1024:  # v7x-class TensorCore: leave Mosaic headroom
        return max(min(cap - 12 * 1024 * 1024, 52 * 1024 * 1024),
                   32 * 1024 * 1024)
    # v6e / v5e: 128 MiB physical -> allow large tiles but keep headroom.
    return min(cap - 16 * 1024 * 1024, 112 * 1024 * 1024)


def _vmem_estimate(tm, tn, tk, h_pad, cbytes):
    f32 = 4
    return (
        2 * tm * h_pad * cbytes          # x tile (double-buffered)
        + 2 * h_pad * h_pad * cbytes     # Wp + Wc (single-buffered, resident)
        + 2 * h_pad * f32                # bp + bc (single-buffered)
        + 3 * tk * tn * cbytes           # W_lm tile (Buffered(3))
        + 2 * tn * f32                   # b_lm tile
        + h_pad * _VLANE * cbytes        # W_score (single-buffered)
        + _VLANE * f32                   # b_score
        + 2 * tm * tn * f32              # logits out tile (double-buffered)
        + 2 * tm * _VLANE * f32          # value out tile
        + tm * h_pad * cbytes            # hidden scratch
    )


# ---------------------------------------------------------------------------
# One-time weight preparation (hoisted out of the per-call forward path)
# ---------------------------------------------------------------------------
def prepare_params(params, *, tn=512, tk=512, compute_dtype=jnp.bfloat16):
    h, v = params["lm_head_w"].shape
    tn = _pick_tile(v, tn, 128)
    tk = _pick_tile(h, tk, 128)
    v_pad = _round_up(v, tn)
    h_pad = _round_up(h, tk)
    cd = compute_dtype
    prepped = {
        "wp": _pad2d(params["policy_w1"].astype(cd), h_pad, h_pad),
        "bp": _pad2d(params["policy_b1"].astype(jnp.float32), 1, h_pad),
        "wlm": _pad2d(params["lm_head_w"].astype(cd), h_pad, v_pad),
        "blm": _pad2d(params["lm_head_b"].astype(jnp.float32), 1, v_pad),
        "wc": _pad2d(params["critic_w1"].astype(cd), h_pad, h_pad),
        "bc": _pad2d(params["critic_b1"].astype(jnp.float32), 1, h_pad),
        "ws": _pad2d(params["score_w"].astype(cd), h_pad, _VLANE),
        "bs": _pad2d(params["score_b"].astype(jnp.float32), 1, _VLANE),
    }
    meta = dict(h=h, v=v, h_pad=h_pad, v_pad=v_pad, tn=tn, tk=tk, cd=cd)
    return prepped, meta


# ---------------------------------------------------------------------------
# Wrapper (mirrors PolicyAndValueWrapper.forward)
# ---------------------------------------------------------------------------
def policy_and_value_wrapper_forward(x, prepped, meta, *, tm=512):
    """x: (B, S, H) float32. Returns (policy_logits (B,S,V), values (B,S,1))."""
    b, s, h = x.shape
    assert h == meta["h"], "hidden size mismatch with prepared params"
    v, h_pad, v_pad = meta["v"], meta["h_pad"], meta["v_pad"]
    tn, tk, cd = meta["tn"], meta["tk"], meta["cd"]
    n = b * s

    tm = _pick_tile(n, tm, 8)
    # Megacore guard: keep >= 2 token tiles so the "parallel" axis can shard.
    if n > 8 and _round_up(n, tm) // tm < 2:
        tm = max(8, _round_up((n + 1) // 2, 8))

    cbytes = jnp.dtype(cd).itemsize
    budget = _vmem_budget_bytes()
    # Shrink tiles (power-of-two halving that preserves padding divisibility)
    # only if the estimate exceeds the per-generation budget.
    while _vmem_estimate(tm, tn, tk, h_pad, cbytes) > budget:
        if tn >= 256 and tn % 256 == 0:
            tn //= 2
        elif tm >= 16 and (tm // 2) % 8 == 0:
            tm //= 2
        elif tk >= 256 and tk % 256 == 0:
            tk //= 2
        else:
            break
    # TODO(synk): for very large H (Wp+Wc not VMEM-resident, e.g. H>=3K bf16 on
    # v7x) split the backbone + value head into their own pallas_call that
    # writes h to HBM and run the lm_head matmul kernel separately.

    n_pad = _round_up(n, tm)
    nk = h_pad // tk
    grid = (n_pad // tm, v_pad // tn, nk)

    x2d = _pad2d(x.reshape(n, h).astype(cd), n_pad, h_pad)

    f32b = 4
    est = _vmem_estimate(tm, tn, tk, h_pad, cbytes)
    vmem_limit = int(min(max(int(est * 1.25), 32 * 1024 * 1024), budget))

    m_tiles = n_pad // tm
    bytes_in = (
        n_pad * h_pad * cbytes                            # x (once per m tile)
        + (2 * h_pad * h_pad + h_pad * _VLANE) * cbytes   # Wp, Wc, W_score
        + (2 * h_pad + _VLANE) * f32b                     # bp, bc, b_score
        + m_tiles * (h_pad * v_pad * cbytes + v_pad * f32b)  # W_lm + b_lm streamed
    )
    bytes_out = n_pad * v_pad * f32b + n_pad * _VLANE * f32b
    cost = pl.CostEstimate(
        flops=2 * n_pad * h_pad * (2 * h_pad + v_pad + _VLANE),
        transcendentals=2 * n_pad * h_pad,
        bytes_accessed=bytes_in + bytes_out,
    )

    kernel = functools.partial(_fused_kernel, tk=tk, nk=nk)

    def _in_specs(use_pipeline_modes):
        def const_spec(shape):
            if use_pipeline_modes:
                return pl.BlockSpec(shape, lambda m, nn, kk: (0, 0),
                                    pipeline_mode=pl.Buffered(1))
            return pl.BlockSpec(shape, lambda m, nn, kk: (0, 0))

        if use_pipeline_modes:
            wlm_spec = pl.BlockSpec((tk, tn), lambda m, nn, kk: (kk, nn),
                                    pipeline_mode=pl.Buffered(3))
        else:
            wlm_spec = pl.BlockSpec((tk, tn), lambda m, nn, kk: (kk, nn))

        return [
            pl.BlockSpec((tm, h_pad), lambda m, nn, kk: (m, 0)),      # x
            const_spec((h_pad, h_pad)),                               # Wp
            const_spec((1, h_pad)),                                   # bp
            wlm_spec,                                                 # W_lm tile
            pl.BlockSpec((1, tn), lambda m, nn, kk: (0, nn)),         # b_lm tile
            const_spec((h_pad, h_pad)),                               # Wc
            const_spec((1, h_pad)),                                   # bc
            const_spec((h_pad, _VLANE)),                              # W_score
            const_spec((1, _VLANE)),                                  # b_score
        ]

    def _run(use_pipeline_modes):
        return pl.pallas_call(
            kernel,
            out_shape=(
                jax.ShapeDtypeStruct((n_pad, v_pad), jnp.float32),
                jax.ShapeDtypeStruct((n_pad, _VLANE), jnp.float32),
            ),
            grid_spec=pltpu.PrefetchScalarGridSpec(
                num_scalar_prefetch=0,
                grid=grid,
                in_specs=_in_specs(use_pipeline_modes),
                out_specs=[
                    # Accumulated in place across K (block index fixed in kk).
                    pl.BlockSpec((tm, tn), lambda m, nn, kk: (m, nn)),
                    pl.BlockSpec((tm, _VLANE), lambda m, nn, kk: (m, 0)),
                ],
                scratch_shapes=[
                    pltpu.VMEM((nk, tm, tk), cd),   # cached policy hidden
                ],
            ),
            compiler_params=pltpu.CompilerParams(
                # token axis parallel (megacore); N/K arbitrary because the
                # hidden-state scratch is produced at (n==0,k==0) and reused.
                dimension_semantics=("parallel", "arbitrary", "arbitrary"),
                vmem_limit_bytes=vmem_limit,
            ),
            cost_estimate=cost,
        )(x2d, prepped["wp"], prepped["bp"], prepped["wlm"], prepped["blm"],
          prepped["wc"], prepped["bc"], prepped["ws"], prepped["bs"])

    try:
        logits_pad, value_pad = _run(True)
    except Exception:
        # TODO(synk): pipeline_mode buffering hints unsupported on this jax
        # version -> fall back to default double-buffered BlockSpecs.
        logits_pad, value_pad = _run(False)

    policy_logits = logits_pad[:n, :v].reshape(b, s, v)
    value_logits = value_pad[:n, :1].reshape(b, s, 1)
    return policy_logits, value_logits


# ---------------------------------------------------------------------------
# Reference (pure JAX, mirrors the kernel's bf16-input / f32-accum math)
# ---------------------------------------------------------------------------
def _reference(x, p, compute_dtype=jnp.bfloat16):
    b, s, h = x.shape
    cd = compute_dtype
    x2d = x.reshape(b * s, h).astype(cd)
    hp = jnp.tanh(
        jnp.dot(x2d, p["policy_w1"].astype(cd),
                preferred_element_type=jnp.float32) + p["policy_b1"]
    )
    logits = (
        jnp.dot(hp.astype(cd), p["lm_head_w"].astype(cd),
                preferred_element_type=jnp.float32) + p["lm_head_b"]
    )
    hc = jnp.tanh(
        jnp.dot(x2d, p["critic_w1"].astype(cd),
                preferred_element_type=jnp.float32) + p["critic_b1"]
    )
    vals = (
        jnp.dot(hc.astype(cd), p["score_w"].astype(cd),
                preferred_element_type=jnp.float32) + p["score_b"]
    )
    return logits.reshape(b, s, -1), vals.reshape(b, s, 1)


if __name__ == "__main__":
    B, S, H, V = 2, 8, 32, 64  # batch, seq, hidden, vocab

    key = jax.random.PRNGKey(0)
    ks = jax.random.split(key, 8)

    params = {
        "policy_w1": jax.random.normal(ks[0], (H, H), jnp.float32) * 0.1,
        "policy_b1": jax.random.normal(ks[1], (1, H), jnp.float32) * 0.1,
        "lm_head_w": jax.random.normal(ks[2], (H, V), jnp.float32) * 0.1,
        "lm_head_b": jax.random.normal(ks[3], (1, V), jnp.float32) * 0.1,
        "critic_w1": jax.random.normal(ks[4], (H, H), jnp.float32) * 0.1,
        "critic_b1": jax.random.normal(ks[5], (1, H), jnp.float32) * 0.1,
        "score_w": jax.random.normal(ks[6], (H, 1), jnp.float32) * 0.1,
        "score_b": jax.random.normal(ks[7], (1, 1), jnp.float32) * 0.1,
    }

    x = jax.random.normal(jax.random.PRNGKey(1), (B, S, H), jnp.float32)

    # One-time weight cast + pad (hoisted out of the forward path).
    prepped, meta = prepare_params(params)
    jax.block_until_ready(prepped)

    policy_logits, value_logits = policy_and_value_wrapper_forward(x, prepped, meta)
    jax.block_until_ready((policy_logits, value_logits))

    ref_logits, ref_values = _reference(x, params)
    assert policy_logits.shape == (B, S, V)
    assert value_logits.shape == (B, S, 1)
    # bf16 MXU inputs / f32 accumulation: allow bf16-level tolerance.
    assert jnp.allclose(policy_logits, ref_logits, atol=2e-2, rtol=2e-2)
    assert jnp.allclose(value_logits, ref_values, atol=2e-2, rtol=2e-2)

    # TODO(synk): the real HF policy / value_model backbones are stand-ins
    # (single tanh projection); only the wrapper's dataflow is reproduced.
    print("KERNEL_OK")
</pallas_src>

<mosaic_0001>
module attributes {stable_mosaic.version = 11 : i64} {
  func.func @_fused_kernel(%arg0: i32, %arg1: i32, %arg2: i32, %arg3: memref<8x32xbf16, #tpu.memory_space<vmem>>, %arg4: memref<32x32xbf16, #tpu.memory_space<vmem>>, %arg5: memref<1x32xf32, #tpu.memory_space<vmem>>, %arg6: memref<32x64xbf16, #tpu.memory_space<vmem>>, %arg7: memref<1x64xf32, #tpu.memory_space<vmem>>, %arg8: memref<32x32xbf16, #tpu.memory_space<vmem>>, %arg9: memref<1x32xf32, #tpu.memory_space<vmem>>, %arg10: memref<32x128xbf16, #tpu.memory_space<vmem>>, %arg11: memref<1x128xf32, #tpu.memory_space<vmem>>, %arg12: memref<8x64xf32, #tpu.memory_space<vmem>>, %arg13: memref<8x128xf32, #tpu.memory_space<vmem>>, %arg14: memref<1x8x32xbf16, #tpu.memory_space<vmem>>) attributes {dimension_semantics = [#tpu.dimension_semantics<parallel>, #tpu.dimension_semantics<arbitrary>, #tpu.dimension_semantics<arbitrary>], iteration_bounds = array<i64: 2, 1, 1>, scalar_prefetch = 0 : i64, scratch_operands = 1 : i64, tpu.core_type = #tpu.core_type<tc>, window_params = [{transform_indices = @transform_0, window_bounds = array<i64: 8, 32>}, {pipeline_mode = #tpu.pipeline_mode<synchronous>, transform_indices = @transform_1, window_bounds = array<i64: 32, 32>}, {pipeline_mode = #tpu.pipeline_mode<synchronous>, transform_indices = @transform_2, window_bounds = array<i64: 1, 32>}, {transform_indices = @transform_3, window_bounds = array<i64: 32, 64>}, {transform_indices = @transform_4, window_bounds = array<i64: 1, 64>}, {pipeline_mode = #tpu.pipeline_mode<synchronous>, transform_indices = @transform_5, window_bounds = array<i64: 32, 32>}, {pipeline_mode = #tpu.pipeline_mode<synchronous>, transform_indices = @transform_6, window_bounds = array<i64: 1, 32>}, {pipeline_mode = #tpu.pipeline_mode<synchronous>, transform_indices = @transform_7, window_bounds = array<i64: 32, 128>}, {pipeline_mode = #tpu.pipeline_mode<synchronous>, transform_indices = @transform_8, window_bounds = array<i64: 1, 128>}, {transform_indices = @transform_9, window_bounds = array<i64: 8, 64>}, {transform_indices = @transform_10, window_bounds = array<i64: 8, 128>}]} {
    %c0_i32 = arith.constant 0 : i32
    %0 = arith.cmpi eq, %arg1, %c0_i32 : i32
    %c0_i32_0 = arith.constant 0 : i32
    %1 = arith.cmpi eq, %arg2, %c0_i32_0 : i32
    %2 = arith.andi %0, %1 : i1
    %3 = arith.extui %2 : i1 to i32
    %c0_i32_1 = arith.constant 0 : i32
    %4 = arith.cmpi ne, %3, %c0_i32_1 : i32
    scf.if %4 {
      %c0_11 = arith.constant 0 : index
      %c0_12 = arith.constant 0 : index
      %19 = vector.load %arg3[%c0_11, %c0_12] : memref<8x32xbf16, #tpu.memory_space<vmem>>, vector<8x32xbf16>
      %c0_13 = arith.constant 0 : index
      %c0_14 = arith.constant 0 : index
      %20 = vector.load %arg4[%c0_13, %c0_14] : memref<32x32xbf16, #tpu.memory_space<vmem>>, vector<32x32xbf16>
      %cst_15 = arith.constant dense<0.000000e+00> : vector<8x32xf32>
      %21 = tpu.matmul %19, %20, %cst_15 {dimension_numbers = #tpu.dot_dimension_numbers<[1], [0], [0], [1], [0, 0, 1, 1], [], []>} : vector<8x32xbf16>, vector<32x32xbf16>, vector<8x32xf32> -> vector<8x32xf32>
      %c0_16 = arith.constant 0 : index
      %c0_17 = arith.constant 0 : index
      %22 = vector.load %arg5[%c0_16, %c0_17] : memref<1x32xf32, #tpu.memory_space<vmem>>, vector<1x32xf32>
      %23 = vector.broadcast %22 : vector<1x32xf32> to vector<8x32xf32>
      %24 = arith.addf %21, %23 : vector<8x32xf32>
      %25 = math.tanh %24 : vector<8x32xf32>
      %26 = arith.truncf %25 : vector<8x32xf32> to vector<8x32xbf16>
      %c0_18 = arith.constant 0 : index
      %c0_19 = arith.constant 0 : index
      %c0_20 = arith.constant 0 : index
      %27 = vector.load %arg14[%c0_18, %c0_19, %c0_20] : memref<1x8x32xbf16, #tpu.memory_space<vmem>>, vector<1x8x32xbf16>
      %28 = vector.shape_cast %27 : vector<1x8x32xbf16> to vector<8x32xbf16>
      %29 = vector.shape_cast %26 : vector<8x32xbf16> to vector<1x8x32xbf16>
      tpu.vector_store %arg14[%c0_18, %c0_19, %c0_20], %29 {strides = array<i32>} : memref<1x8x32xbf16, #tpu.memory_space<vmem>>, vector<1x8x32xbf16>,
      %c0_21 = arith.constant 0 : index
      %c0_22 = arith.constant 0 : index
      %30 = vector.load %arg8[%c0_21, %c0_22] : memref<32x32xbf16, #tpu.memory_space<vmem>>, vector<32x32xbf16>
      %cst_23 = arith.constant dense<0.000000e+00> : vector<8x32xf32>
      %31 = tpu.matmul %19, %30, %cst_23 {dimension_numbers = #tpu.dot_dimension_numbers<[1], [0], [0], [1], [0, 0, 1, 1], [], []>} : vector<8x32xbf16>, vector<32x32xbf16>, vector<8x32xf32> -> vector<8x32xf32>
      %c0_24 = arith.constant 0 : index
      %c0_25 = arith.constant 0 : index
      %32 = vector.load %arg9[%c0_24, %c0_25] : memref<1x32xf32, #tpu.memory_space<vmem>>, vector<1x32xf32>
      %33 = vector.broadcast %32 : vector<1x32xf32> to vector<8x32xf32>
      %34 = arith.addf %31, %33 : vector<8x32xf32>
      %35 = math.tanh %34 : vector<8x32xf32>
      %36 = arith.truncf %35 : vector<8x32xf32> to vector<8x32xbf16>
      %c0_26 = arith.constant 0 : index
      %c0_27 = arith.constant 0 : index
      %37 = vector.load %arg10[%c0_26, %c0_27] : memref<32x128xbf16, #tpu.memory_space<vmem>>, vector<32x128xbf16>
      %cst_28 = arith.constant dense<0.000000e+00> : vector<8x128xf32>
      %38 = tpu.matmul %36, %37, %cst_28 {dimension_numbers = #tpu.dot_dimension_numbers<[1], [0], [0], [1], [0, 0, 1, 1], [], []>} : vector<8x32xbf16>, vector<32x128xbf16>, vector<8x128xf32> -> vector<8x128xf32>
      %c0_29 = arith.constant 0 : index
      %c0_30 = arith.constant 0 : index
      %39 = vector.load %arg11[%c0_29, %c0_30] : memref<1x128xf32, #tpu.memory_space<vmem>>, vector<1x128xf32>
      %40 = vector.broadcast %39 : vector<1x128xf32> to vector<8x128xf32>
      %41 = arith.addf %38, %40 : vector<8x128xf32>
      %c0_31 = arith.constant 0 : index
      %c0_32 = arith.constant 0 : index
      %42 = vector.load %arg13[%c0_31, %c0_32] : memref<8x128xf32, #tpu.memory_space<vmem>>, vector<8x128xf32>
      tpu.vector_store %arg13[%c0_31, %c0_32], %41 {strides = array<i32>} : memref<8x128xf32, #tpu.memory_space<vmem>>, vector<8x128xf32>,
    } else {
    }
    %5 = arith.index_cast %arg2 : i32 to index
    %c0 = arith.constant 0 : index
    %c0_2 = arith.constant 0 : index
    %6 = vector.load %arg14[%5, %c0, %c0_2] : memref<1x8x32xbf16, #tpu.memory_space<vmem>>, vector<1x8x32xbf16>
    %7 = vector.shape_cast %6 : vector<1x8x32xbf16> to vector<8x32xbf16>
    %c0_3 = arith.constant 0 : index
    %c0_4 = arith.constant 0 : index
    %8 = vector.load %arg6[%c0_3, %c0_4] : memref<32x64xbf16, #tpu.memory_space<vmem>>, vector<32x64xbf16>
    %cst = arith.constant dense<0.000000e+00> : vector<8x64xf32>
    %9 = tpu.matmul %7, %8, %cst {dimension_numbers = #tpu.dot_dimension_numbers<[1], [0], [0], [1], [0, 0, 1, 1], [], []>} : vector<8x32xbf16>, vector<32x64xbf16>, vector<8x64xf32> -> vector<8x64xf32>
    %c0_i32_5 = arith.constant 0 : i32
    %10 = arith.cmpi eq, %arg2, %c0_i32_5 : i32
    %11 = arith.extui %10 : i1 to i32
    %c0_i32_6 = arith.constant 0 : i32
    %12 = arith.cmpi ne, %11, %c0_i32_6 : i32
    scf.if %12 {
      %c0_11 = arith.constant 0 : index
      %c0_12 = arith.constant 0 : index
      %19 = vector.load %arg12[%c0_11, %c0_12] : memref<8x64xf32, #tpu.memory_space<vmem>>, vector<8x64xf32>
      tpu.vector_store %arg12[%c0_11, %c0_12], %9 {strides = array<i32>} : memref<8x64xf32, #tpu.memory_space<vmem>>, vector<8x64xf32>,
    } else {
    }
    %c0_i32_7 = arith.constant 0 : i32
    %13 = arith.cmpi ne, %arg2, %c0_i32_7 : i32
    %14 = arith.extui %13 : i1 to i32
    %c0_i32_8 = arith.constant 0 : i32
    %15 = arith.cmpi ne, %14, %c0_i32_8 : i32
    scf.if %15 {
      %c0_11 = arith.constant 0 : index
      %c0_12 = arith.constant 0 : index
      %19 = vector.load %arg12[%c0_11, %c0_12] : memref<8x64xf32, #tpu.memory_space<vmem>>, vector<8x64xf32>
      %20 = arith.addf %19, %9 : vector<8x64xf32>
      %c0_13 = arith.constant 0 : index
      %c0_14 = arith.constant 0 : index
      %21 = vector.load %arg12[%c0_13, %c0_14] : memref<8x64xf32, #tpu.memory_space<vmem>>, vector<8x64xf32>
      tpu.vector_store %arg12[%c0_13, %c0_14], %20 {strides = array<i32>} : memref<8x64xf32, #tpu.memory_space<vmem>>, vector<8x64xf32>,
    } else {
    }
    %c0_i32_9 = arith.constant 0 : i32
    %16 = arith.cmpi eq, %arg2, %c0_i32_9 : i32
    %17 = arith.extui %16 : i1 to i32
    %c0_i32_10 = arith.constant 0 : i32
    %18 = arith.cmpi ne, %17, %c0_i32_10 : i32
    scf.if %18 {
      %c0_11 = arith.constant 0 : index
      %c0_12 = arith.constant 0 : index
      %19 = vector.load %arg12[%c0_11, %c0_12] : memref<8x64xf32, #tpu.memory_space<vmem>>, vector<8x64xf32>
      %c0_13 = arith.constant 0 : index
      %c0_14 = arith.constant 0 : index
      %20 = vector.load %arg7[%c0_13, %c0_14] : memref<1x64xf32, #tpu.memory_space<vmem>>, vector<1x64xf32>
      %21 = vector.broadcast %20 : vector<1x64xf32> to vector<8x64xf32>
      %22 = arith.addf %19, %21 : vector<8x64xf32>
      %c0_15 = arith.constant 0 : index
      %c0_16 = arith.constant 0 : index
      %23 = vector.load %arg12[%c0_15, %c0_16] : memref<8x64xf32, #tpu.memory_space<vmem>>, vector<8x64xf32>
      tpu.vector_store %arg12[%c0_15, %c0_16], %22 {strides = array<i32>} : memref<8x64xf32, #tpu.memory_space<vmem>>, vector<8x64xf32>,
    } else {
    }
    return
  }
  func.func @transform_0(%arg0: i32, %arg1: i32, %arg2: i32) -> (i32, i32) {
    %c0_i32 = arith.constant 0 : i32
    %c0_i32_0 = arith.constant 0 : i32
    return %arg0, %c0_i32 : i32, i32
  }
  func.func @transform_1(%arg0: i32, %arg1: i32, %arg2: i32) -> (i32, i32) {
    %c0_i32 = arith.constant 0 : i32
    %c0_i32_0 = arith.constant 0 : i32
    %c0_i32_1 = arith.constant 0 : i32
    return %c0_i32, %c0_i32_0 : i32, i32
  }
  func.func @transform_2(%arg0: i32, %arg1: i32, %arg2: i32) -> (i32, i32) {
    %c0_i32 = arith.constant 0 : i32
    %c0_i32_0 = arith.constant 0 : i32
    %c0_i32_1 = arith.constant 0 : i32
    return %c0_i32, %c0_i32_0 : i32, i32
  }
  func.func @transform_3(%arg0: i32, %arg1: i32, %arg2: i32) -> (i32, i32) {
    %c0_i32 = arith.constant 0 : i32
    return %arg2, %arg1 : i32, i32
  }
  func.func @transform_4(%arg0: i32, %arg1: i32, %arg2: i32) -> (i32, i32) {
    %c0_i32 = arith.constant 0 : i32
    %c0_i32_0 = arith.constant 0 : i32
    return %c0_i32, %arg1 : i32, i32
  }
  func.func @transform_5(%arg0: i32, %arg1: i32, %arg2: i32) -> (i32, i32) {
    %c0_i32 = arith.constant 0 : i32
    %c0_i32_0 = arith.constant 0 : i32
    %c0_i32_1 = arith.constant 0 : i32
    return %c0_i32, %c0_i32_0 : i32, i32
  }
  func.func @transform_6(%arg0: i32, %arg1: i32, %arg2: i32) -> (i32, i32) {
    %c0_i32 = arith.constant 0 : i32
    %c0_i32_0 = arith.constant 0 : i32
    %c0_i32_1 = arith.constant 0 : i32
    return %c0_i32, %c0_i32_0 : i32, i32
  }
  func.func @transform_7(%arg0: i32, %arg1: i32, %arg2: i32) -> (i32, i32) {
    %c0_i32 = arith.constant 0 : i32
    %c0_i32_0 = arith.constant 0 : i32
    %c0_i32_1 = arith.constant 0 : i32
    return %c0_i32, %c0_i32_0 : i32, i32
  }
  func.func @transform_8(%arg0: i32, %arg1: i32, %arg2: i32) -> (i32, i32) {
    %c0_i32 = arith.constant 0 : i32
    %c0_i32_0 = arith.constant 0 : i32
    %c0_i32_1 = arith.constant 0 : i32
    return %c0_i32, %c0_i32_0 : i32, i32
  }
  func.func @transform_9(%arg0: i32, %arg1: i32, %arg2: i32) -> (i32, i32) {
    %c0_i32 = arith.constant 0 : i32
    return %arg0, %arg1 : i32, i32
  }
  func.func @transform_10(%arg0: i32, %arg1: i32, %arg2: i32) -> (i32, i32) {
    %c0_i32 = arith.constant 0 : i32
    %c0_i32_0 = arith.constant 0 : i32
    return %arg0, %c0_i32 : i32, i32
  }
}

</mosaic_0001>

<llo_original>
// kernel: tpu_custom_call.1
$region0: #{tpu_custom_call.1}
  #allocation0 [shape = 'u32[]', space=smem, size = 0x4, offset = 0x4, fixed_abs, tag = 'smem constant byte address 0x4 - core index']
  #allocation1 [shape = 'u32[144,128]{1,0:T(1,128)}', space=vmem, size = 0x12000, scoped, tag = 'internal scratch']
  #allocation2 [shape = 'bf16[1,8,32]{2,1,0:T(8,128)(2,1)}', space=vmem, size = 0x800, scoped, tag = 'scratch operand']
  %s0 = inlined_call_operand.hbm [shape: bf16[16,32], index: 0, kind: input, shape index: {}]
  %s1 = inlined_call_operand.hbm [shape: bf16[32,32], index: 1, kind: input, shape index: {}]
  %s2 = inlined_call_operand.vmem [shape: f32[1,32], index: 2, kind: input, shape index: {}]
  %s3 = inlined_call_operand.hbm [shape: bf16[32,64], index: 3, kind: input, shape index: {}]
  %s4 = inlined_call_operand.vmem [shape: f32[1,64], index: 4, kind: input, shape index: {}]
  %s5 = inlined_call_operand.vmem [shape: bf16[32,32], index: 5, kind: input, shape index: {}]
  %s6 = inlined_call_operand.vmem [shape: f32[1,32], index: 6, kind: input, shape index: {}]
  %s7 = inlined_call_operand.hbm [shape: bf16[32,128], index: 7, kind: input, shape index: {}]
  %s8 = inlined_call_operand.vmem [shape: f32[1,128], index: 8, kind: input, shape index: {}]
  %s9 = inlined_call_operand.hbm [shape: f32[16,64], index: 9, kind: output, shape index: {0}]
  %s10 = inlined_call_operand.hbm [shape: f32[16,128], index: 10, kind: output, shape index: {1}]
  %11 = xla_tuple %s9, %s10
  %s12 = sld [smem:[#allocation0]]
  $region109: #{tpu_custom_call.1} parent=0
    _
  %s14 = ssub.s32 1, %s12
  %s15 = scalar_select 0, %s14, %s12
  $region1: #{tpu_custom_call.1} parent=0
    #allocation3 [shape = 'u8[4096]{0}', space=vmem, size = 0x1000, scoped, tag = 'input window, operand 0']
    #allocation4 [shape = 's32[2]{0}', space=sflag, size = 0x8, scoped, tag = 'scoped memory for tpu_custom_call.1']
    #allocation5 [shape = 's32[2]{0}', space=sflag, size = 0x8, scoped, tag = 'scoped memory for tpu_custom_call.1']
    #allocation6 [shape = 'u8[8192]{0}', space=vmem, size = 0x2000, scoped, tag = 'input window, operand 1, single buffered']
    #allocation7 [shape = 's32[1]{0}', space=sflag, size = 0x4, scoped, tag = 'scoped memory for tpu_custom_call.1']
    #allocation8 [shape = 'u8[8192]{0}', space=vmem, size = 0x2000, scoped, tag = 'input window, operand 3, single buffered']
    #allocation9 [shape = 'u8[8192]{0}', space=vmem, size = 0x2000, scoped, tag = 'input window, operand 7, single buffered']
    #allocation10 [shape = 's32[1]{0}', space=sflag, size = 0x4, scoped, tag = 'scoped memory for tpu_custom_call.1']
    #allocation11 [shape = 'u8[8192]{0}', space=vmem, size = 0x2000, scoped, tag = 'output window, operand 0']
    #allocation12 [shape = 'u8[8192]{0}', space=vmem, size = 0x2000, scoped, tag = 'output window, operand 1']
    #allocation13 [shape = 's32[2]{0}', space=sflag, size = 0x8, scoped, tag = 'scoped memory for tpu_custom_call.1']
    %16 = vsyncpa [#allocation4], 0
    %s17 = scalar_lea.sflag [#allocation4], 1
    %18 = vsyncpa %s17, 0
    %19 = vsyncpa [#allocation7], 0
    %20 = vsyncpa [#allocation10], 0
    %21 = vsyncpa [#allocation5], 0
    %s22 = scalar_lea.sflag [#allocation5], 1
    %23 = vsyncpa %s22, 0
    %24 = vsyncpa [#allocation13], 0
    %s25 = scalar_lea.sflag [#allocation13], 1
    %26 = vsyncpa %s25, 0
    loop: start=0, step=1, limit=4
    $region2: #{tpu_custom_call.1} parent=1 // loop_pre_header
      _
    $region3: #{tpu_custom_call.1} parent=1 // loop_header
      %s28 = sphi 0, %s32
      %p29 = scmp.ge.s32.totalorder %s28, 4
      %s35 = sphi 0, %s54
      %s36 = sphi 0, %s50
      %s37 = sphi 0, %s46
      %s38 = sphi 0, %s35
      %s39 = sphi 0, %s36
      %s40 = sphi 0, %s37
      %s41 = sphi 0, %s38
      %s42 = sphi 0, %s39
      %s43 = sphi 0, %s40
      %s57 = sphi 0, %s59
      %s60 = sphi 0, %s57
      %s61 = sphi 0, %s60
      %s77 = sphi 0, %s61
      %s81 = sphi 0, %s81
      %s83 = sphi 0, %s81
      %s84 = sphi 0, %s83
      %s98 = sphi 0, %s84
      %s102 = sphi 0, %s102
      %s104 = sphi 0, %s102
      %s105 = sphi 0, %s104
      %s119 = sphi 0, %s105
      %s127 = sphi 0, %s129
      %s130 = sphi 0, %s127
      %s131 = sphi 0, %s130
      %s147 = sphi 0, %s131
      %s153 = sphi 0, %s155
      %s156 = sphi 0, %s153
      %s157 = sphi 0, %s156
      %s173 = sphi 0, %s157
      %s177 = sphi 0, %s177
      %s179 = sphi 0, %s177
      %s180 = sphi 0, %s179
      %s194 = sphi 0, %s180
      %s198 = sphi 0, %s198
      %s200 = sphi 0, %s198
      %s201 = sphi 0, %s200
      %s215 = sphi 0, %s201
      %s219 = sphi 0, %s219
      %s221 = sphi 0, %s219
      %s222 = sphi 0, %s221
      %s236 = sphi 0, %s222
      %s240 = sphi 0, %s240
      %s242 = sphi 0, %s240
      %s243 = sphi 0, %s242
      %s257 = sphi 0, %s243
      %s265 = sphi 0, %s267
      %s268 = sphi 0, %s265
      %s269 = sphi 0, %s268
      %s285 = sphi 0, %s269
      %s291 = sphi 0, %s293
      %s294 = sphi 0, %s291
      %s295 = sphi 0, %s294
      %s311 = sphi 0, %s295
    $region4: #{tpu_custom_call.1} parent=1 // loop_header_branch
      %31 = sbr.rel (%p29) target = $region8
    $region5: #{tpu_custom_call.1} parent=1 // loop_body
      %s33 = ssub.s32 %s28, 1
      %s34 = ssub.s32 %s28, 2
      %s44 = sadd.s32 1, %s37
      %p45 = scmp.ge.s32.totalorder %s44, 1
      %s46 = scalar_select %p45, 0, %s44
      %s47 = sadd.s32 1, %s36
      %s48 = scalar_select %p45, %s47, %s36
      %p49 = scmp.ge.s32.totalorder %s48, 1
      %s50 = scalar_select %p49, 0, %s48
      %s51 = sadd.s32 1, %s35
      %s52 = scalar_select %p49, %s51, %s35
      %p53 = scmp.ge.s32.totalorder %s52, 2
      %s54 = scalar_select %p53, 0, %s52
      %s55 = ssub.s32 %s35, %s54
      %p56 = scmp.eq.s32.totalorder %s55, 0
      %s58 = sadd.s32 %s57, 1
      %s59 = scalar_select %p56, %s57, %s58
      %p62 = pneg %p56
      %p63 = scmp.eq.s32.totalorder %s28, 1
      %p64 = por %p62, %p63
      %p65 = scmp.ne.s32.totalorder %s57, %s60
      %p66 = scmp.eq.s32.totalorder %s28, 0
      %p67 = por %p65, %p66
      %p68 = scmp.ne.s32.totalorder %s57, %s60
      %p69 = scmp.eq.s32.totalorder %s33, 1
      %p70 = por %p68, %p69
      %p71 = scmp.ne.s32.totalorder %s60, %s61
      %p72 = scmp.eq.s32.totalorder %s33, 0
      %p73 = por %p71, %p72
      %p74 = scmp.ne.s32.totalorder %s60, %s61
      %p75 = scmp.eq.s32.totalorder %s34, 1
      %p76 = por %p74, %p75
      %p78 = scmp.ne.s32.totalorder %s61, %s77
      %p79 = scmp.eq.s32.totalorder %s34, 0
      %p80 = por %p78, %p79
      %s82 = sadd.s32 %s81, 1
      %p85 = scmp.eq.s32.totalorder %s28, 1
      %p86 = scmp.ne.s32.totalorder %s81, %s83
      %p87 = scmp.eq.s32.totalorder %s28, 0
      %p88 = por %p86, %p87
      %p89 = scmp.ne.s32.totalorder %s81, %s83
      %p90 = scmp.eq.s32.totalorder %s33, 1
      %p91 = por %p89, %p90
      %p92 = scmp.ne.s32.totalorder %s83, %s84
      %p93 = scmp.eq.s32.totalorder %s33, 0
      %p94 = por %p92, %p93
      %p95 = scmp.ne.s32.totalorder %s83, %s84
      %p96 = scmp.eq.s32.totalorder %s34, 1
      %p97 = por %p95, %p96
      %p99 = scmp.ne.s32.totalorder %s84, %s98
      %p100 = scmp.eq.s32.totalorder %s34, 0
      %p101 = por %p99, %p100
      %s103 = sadd.s32 %s102, 1
      %p106 = scmp.eq.s32.totalorder %s28, 1
      %p107 = scmp.ne.s32.totalorder %s102, %s104
      %p108 = scmp.eq.s32.totalorder %s28, 0
      %p109 = por %p107, %p108
      %p110 = scmp.ne.s32.totalorder %s102, %s104
      %p111 = scmp.eq.s32.totalorder %s33, 1
      %p112 = por %p110, %p111
      %p113 = scmp.ne.s32.totalorder %s104, %s105
      %p114 = scmp.eq.s32.totalorder %s33, 0
      %p115 = por %p113, %p114
      %p116 = scmp.ne.s32.totalorder %s104, %s105
      %p117 = scmp.eq.s32.totalorder %s34, 1
      %p118 = por %p116, %p117
      %p120 = scmp.ne.s32.totalorder %s105, %s119
      %p121 = scmp.eq.s32.totalorder %s34, 0
      %p122 = por %p120, %p121
      %s123 = ssub.s32 %s37, %s46
      %s124 = ssub.s32 %s36, %s50
      %s125 = sor.u32 %s123, %s124
      %p126 = scmp.eq.s32.totalorder %s125, 0
      %s128 = sadd.s32 %s127, 1
      %s129 = scalar_select %p126, %s127, %s128
      %p132 = pneg %p126
      %p133 = scmp.eq.s32.totalorder %s28, 1
      %p134 = por %p132, %p133
      %p135 = scmp.ne.s32.totalorder %s127, %s130
      %p136 = scmp.eq.s32.totalorder %s28, 0
      %p137 = por %p135, %p136
      %p138 = scmp.ne.s32.totalorder %s127, %s130
      %p139 = scmp.eq.s32.totalorder %s33, 1
      %p140 = por %p138, %p139
      %p141 = scmp.ne.s32.totalorder %s130, %s131
      %p142 = scmp.eq.s32.totalorder %s33, 0
      %p143 = por %p141, %p142
      %p144 = scmp.ne.s32.totalorder %s130, %s131
      %p145 = scmp.eq.s32.totalorder %s34, 1
      %p146 = por %p144, %p145
      %p148 = scmp.ne.s32.totalorder %s131, %s147
      %p149 = scmp.eq.s32.totalorder %s34, 0
      %p150 = por %p148, %p149
      %s151 = ssub.s32 %s36, %s50
      %p152 = scmp.eq.s32.totalorder %s151, 0
      %s154 = sadd.s32 %s153, 1
      %s155 = scalar_select %p152, %s153, %s154
      %p158 = pneg %p152
      %p159 = scmp.eq.s32.totalorder %s28, 1
      %p160 = por %p158, %p159
      %p161 = scmp.ne.s32.totalorder %s153, %s156
      %p162 = scmp.eq.s32.totalorder %s28, 0
      %p163 = por %p161, %p162
      %p164 = scmp.ne.s32.totalorder %s153, %s156
      %p165 = scmp.eq.s32.totalorder %s33, 1
      %p166 = por %p164, %p165
      %p167 = scmp.ne.s32.totalorder %s156, %s157
      %p168 = scmp.eq.s32.totalorder %s33, 0
      %p169 = por %p167, %p168
      %p170 = scmp.ne.s32.totalorder %s156, %s157
      %p171 = scmp.eq.s32.totalorder %s34, 1
      %p172 = por %p170, %p171
      %p174 = scmp.ne.s32.totalorder %s157, %s173
      %p175 = scmp.eq.s32.totalorder %s34, 0
      %p176 = por %p174, %p175
      %s178 = sadd.s32 %s177, 1
      %p181 = scmp.eq.s32.totalorder %s28, 1
      %p182 = scmp.ne.s32.totalorder %s177, %s179
      %p183 = scmp.eq.s32.totalorder %s28, 0
      %p184 = por %p182, %p183
      %p185 = scmp.ne.s32.totalorder %s177, %s179
      %p186 = scmp.eq.s32.totalorder %s33, 1
      %p187 = por %p185, %p186
      %p188 = scmp.ne.s32.totalorder %s179, %s180
      %p189 = scmp.eq.s32.totalorder %s33, 0
      %p190 = por %p188, %p189
      %p191 = scmp.ne.s32.totalorder %s179, %s180
      %p192 = scmp.eq.s32.totalorder %s34, 1
      %p193 = por %p191, %p192
      %p195 = scmp.ne.s32.totalorder %s180, %s194
      %p196 = scmp.eq.s32.totalorder %s34, 0
      %p197 = por %p195, %p196
      %s199 = sadd.s32 %s198, 1
      %p202 = scmp.eq.s32.totalorder %s28, 1
      %p203 = scmp.ne.s32.totalorder %s198, %s200
      %p204 = scmp.eq.s32.totalorder %s28, 0
      %p205 = por %p203, %p204
      %p206 = scmp.ne.s32.totalorder %s198, %s200
      %p207 = scmp.eq.s32.totalorder %s33, 1
      %p208 = por %p206, %p207
      %p209 = scmp.ne.s32.totalorder %s200, %s201
      %p210 = scmp.eq.s32.totalorder %s33, 0
      %p211 = por %p209, %p210
      %p212 = scmp.ne.s32.totalorder %s200, %s201
      %p213 = scmp.eq.s32.totalorder %s34, 1
      %p214 = por %p212, %p213
      %p216 = scmp.ne.s32.totalorder %s201, %s215
      %p217 = scmp.eq.s32.totalorder %s34, 0
      %p218 = por %p216, %p217
      %s220 = sadd.s32 %s219, 1
      %p223 = scmp.eq.s32.totalorder %s28, 1
      %p224 = scmp.ne.s32.totalorder %s219, %s221
      %p225 = scmp.eq.s32.totalorder %s28, 0
      %p226 = por %p224, %p225
      %p227 = scmp.ne.s32.totalorder %s219, %s221
      %p228 = scmp.eq.s32.totalorder %s33, 1
      %p229 = por %p227, %p228
      %p230 = scmp.ne.s32.totalorder %s221, %s222
      %p231 = scmp.eq.s32.totalorder %s33, 0
      %p232 = por %p230, %p231
      %p233 = scmp.ne.s32.totalorder %s221, %s222
      %p234 = scmp.eq.s32.totalorder %s34, 1
      %p235 = por %p233, %p234
      %p237 = scmp.ne.s32.totalorder %s222, %s236
      %p238 = scmp.eq.s32.totalorder %s34, 0
      %p239 = por %p237, %p238
      %s241 = sadd.s32 %s240, 1
      %p244 = scmp.eq.s32.totalorder %s28, 1
      %p245 = scmp.ne.s32.totalorder %s240, %s242
      %p246 = scmp.eq.s32.totalorder %s28, 0
      %p247 = por %p245, %p246
      %p248 = scmp.ne.s32.totalorder %s240, %s242
      %p249 = scmp.eq.s32.totalorder %s33, 1
      %p250 = por %p248, %p249
      %p251 = scmp.ne.s32.totalorder %s242, %s243
      %p252 = scmp.eq.s32.totalorder %s33, 0
      %p253 = por %p251, %p252
      %p254 = scmp.ne.s32.totalorder %s242, %s243
      %p255 = scmp.eq.s32.totalorder %s34, 1
      %p256 = por %p254, %p255
      %p258 = scmp.ne.s32.totalorder %s243, %s257
      %p259 = scmp.eq.s32.totalorder %s34, 0
      %p260 = por %p258, %p259
      %s261 = ssub.s32 %s35, %s54
      %s262 = ssub.s32 %s36, %s50
      %s263 = sor.u32 %s261, %s262
      %p264 = scmp.eq.s32.totalorder %s263, 0
      %s266 = sadd.s32 %s265, 1
      %s267 = scalar_select %p264, %s265, %s266
      %p270 = pneg %p264
      %p271 = scmp.eq.s32.totalorder %s28, 1
      %p272 = por %p270, %p271
      %p273 = scmp.ne.s32.totalorder %s265, %s268
      %p274 = scmp.eq.s32.totalorder %s28, 0
      %p275 = por %p273, %p274
      %p276 = scmp.ne.s32.totalorder %s265, %s268
      %p277 = scmp.eq.s32.totalorder %s33, 1
      %p278 = por %p276, %p277
      %p279 = scmp.ne.s32.totalorder %s268, %s269
      %p280 = scmp.eq.s32.totalorder %s33, 0
      %p281 = por %p279, %p280
      %p282 = scmp.ne.s32.totalorder %s268, %s269
      %p283 = scmp.eq.s32.totalorder %s34, 1
      %p284 = por %p282, %p283
      %p286 = scmp.ne.s32.totalorder %s269, %s285
      %p287 = scmp.eq.s32.totalorder %s34, 0
      %p288 = por %p286, %p287
      %s289 = ssub.s32 %s35, %s54
      %p290 = scmp.eq.s32.totalorder %s289, 0
      %s292 = sadd.s32 %s291, 1
      %s293 = scalar_select %p290, %s291, %s292
      %p296 = pneg %p290
      %p297 = scmp.eq.s32.totalorder %s28, 1
      %p298 = por %p296, %p297
      %p299 = scmp.ne.s32.totalorder %s291, %s294
      %p300 = scmp.eq.s32.totalorder %s28, 0
      %p301 = por %p299, %p300
      %p302 = scmp.ne.s32.totalorder %s291, %s294
      %p303 = scmp.eq.s32.totalorder %s33, 1
      %p304 = por %p302, %p303
      %p305 = scmp.ne.s32.totalorder %s294, %s295
      %p306 = scmp.eq.s32.totalorder %s33, 0
      %p307 = por %p305, %p306
      %p308 = scmp.ne.s32.totalorder %s294, %s295
      %p309 = scmp.eq.s32.totalorder %s34, 1
      %p310 = por %p308, %p309
      %p312 = scmp.ne.s32.totalorder %s295, %s311
      %p313 = scmp.eq.s32.totalorder %s34, 0
      %p314 = por %p312, %p313
      %p315 = scmp.le.s32.totalorder 1, %s28
      %p316 = scmp.lt.s32.totalorder %s28, 3
      %p317 = pnand %p315, %p316
      %p318 = pneg %p317
      // Predicated region
      $region9: #{tpu_custom_call.1} parent=5 // pred_check
        _
      $region10: #{tpu_custom_call.1} parent=5 // pred_check_branch
        %320 = sbr.rel (%p317) target = $region12
      $region11: #{tpu_custom_call.1} parent=5 // pred_region
        %s321 = ssub.s32 %s28, 1
        // Predicated region
        $region13: #{tpu_custom_call.1} parent=11 // pred_check
          %p322 = pneg %p94
        $region14: #{tpu_custom_call.1} parent=11 // pred_check_branch
          %324 = sbr.rel (%p322) target = $region16
        $region15: #{tpu_custom_call.1} parent=11 // pred_region
          %s326 = ssub.s32 256, 256
          %327 = vsyncadd [#allocation7], %s326
          %s328 = sshll.u32 [#allocation6], 4
          %s329 = int_to_ptr.vmem [resolvable:$true] %s328
          %334 = dma.hbm_to_vmem [thread:$0]  %s1, 256, %s329, [#allocation7], 64, 64, 4
        $region16: #{tpu_custom_call.1} parent=11 // pred_fallthru
          _
        // Predicated region
        $region17: #{tpu_custom_call.1} parent=11 // pred_check
          %p335 = pneg %p115
        $region18: #{tpu_custom_call.1} parent=11 // pred_check_branch
          %337 = sbr.rel (%p335) target = $region20
        $region19: #{tpu_custom_call.1} parent=11 // pred_region
          _
        $region20: #{tpu_custom_call.1} parent=11 // pred_fallthru
          _
        // Predicated region
        $region21: #{tpu_custom_call.1} parent=11 // pred_check
          %p338 = pneg %p143
        $region22: #{tpu_custom_call.1} parent=11 // pred_check_branch
          %340 = sbr.rel (%p338) target = $region24
        $region23: #{tpu_custom_call.1} parent=11 // pred_region
          %s341 = smul.u32 4, %s40
          %s343 = ssub.s32 256, 256
          %344 = vsyncadd [#allocation7], %s343
          %s345 = sadd.s32 %s39, %s341
          %s346 = smul.addr %s345, 64
          %s347 = scalar_lea.hbm %s3, %s346
          %s348 = sshll.u32 [#allocation8], 4
          %s349 = int_to_ptr.vmem [resolvable:$true] %s348
          %354 = dma.hbm_to_vmem [thread:$0]  %s347, 256, %s349, [#allocation7], 64, 64, 4
        $region24: #{tpu_custom_call.1} parent=11 // pred_fallthru
          _
        // Predicated region
        $region25: #{tpu_custom_call.1} parent=11 // pred_check
          %p355 = pneg %p169
        $region26: #{tpu_custom_call.1} parent=11 // pred_check_branch
          %357 = sbr.rel (%p355) target = $region28
        $region27: #{tpu_custom_call.1} parent=11 // pred_region
          %p358 = scmp.lt.s32.totalorder %s39, 0
          %s359 = scalar_select %p358, %s39, 0
          %s360 = scalar_lea.vmem %s4, %s359
        $region28: #{tpu_custom_call.1} parent=11 // pred_fallthru
          _
        // Predicated region
        $region29: #{tpu_custom_call.1} parent=11 // pred_check
          %p361 = pneg %p190
        $region30: #{tpu_custom_call.1} parent=11 // pred_check_branch
          %363 = sbr.rel (%p361) target = $region32
        $region31: #{tpu_custom_call.1} parent=11 // pred_region
          _
        $region32: #{tpu_custom_call.1} parent=11 // pred_fallthru
          _
        // Predicated region
        $region33: #{tpu_custom_call.1} parent=11 // pred_check
          %p364 = pneg %p211
        $region34: #{tpu_custom_call.1} parent=11 // pred_check_branch
          %366 = sbr.rel (%p364) target = $region36
        $region35: #{tpu_custom_call.1} parent=11 // pred_region
          _
        $region36: #{tpu_custom_call.1} parent=11 // pred_fallthru
          _
        // Predicated region
        $region37: #{tpu_custom_call.1} parent=11 // pred_check
          %p367 = pneg %p232
        $region38: #{tpu_custom_call.1} parent=11 // pred_check_branch
          %369 = sbr.rel (%p367) target = $region40
        $region39: #{tpu_custom_call.1} parent=11 // pred_region
          %s371 = ssub.s32 256, 256
          %372 = vsyncadd [#allocation10], %s371
          %s373 = sshll.u32 [#allocation9], 4
          %s374 = int_to_ptr.vmem [resolvable:$true] %s373
          %379 = dma.hbm_to_vmem [thread:$0]  %s7, 256, %s374, [#allocation10], 64, 64, 4
        $region40: #{tpu_custom_call.1} parent=11 // pred_fallthru
          _
        // Predicated region
        $region41: #{tpu_custom_call.1} parent=11 // pred_check
          %p380 = pneg %p253
        $region42: #{tpu_custom_call.1} parent=11 // pred_check_branch
          %382 = sbr.rel (%p380) target = $region44
        $region43: #{tpu_custom_call.1} parent=11 // pred_region
          _
        $region44: #{tpu_custom_call.1} parent=11 // pred_fallthru
          _
      $region12: #{tpu_custom_call.1} parent=5 // pred_fallthru
        _
      %p383 = scmp.lt.s32.totalorder %s28, 2
      // Predicated region
      $region45: #{tpu_custom_call.1} parent=5 // pred_check
        %p384 = pneg %p383
      $region46: #{tpu_custom_call.1} parent=5 // pred_check_branch
        %386 = sbr.rel (%p384) target = $region48
      $region47: #{tpu_custom_call.1} parent=5 // pred_region
        // Predicated region
        $region49: #{tpu_custom_call.1} parent=47 // pred_check
          %p387 = pneg %p67
        $region50: #{tpu_custom_call.1} parent=47 // pred_check_branch
          %389 = sbr.rel (%p387) target = $region52
        $region51: #{tpu_custom_call.1} parent=47 // pred_region
          %s390 = sand.u32 %s57, 1
          %s391 = scalar_lea.sflag [#allocation4], %s390
          %s392 = sand.u32 %s57, 1
          %s393 = smul.addr %s392, 4
          %s394 = scalar_lea.vmem [#allocation3], %s393
          %s396 = ssub.s32 64, 64
          %397 = vsyncadd %s391, %s396
          %s398 = smul.addr %s35, 64
          %s399 = scalar_lea.hbm %s0, %s398
          %s401 = sshll.u32 %s394, 4
          %s402 = int_to_ptr.vmem [resolvable:$true] %s401
          %404 = dma.hbm_to_vmem [thread:$0]  %s399, 64, %s402, %s391
        $region52: #{tpu_custom_call.1} parent=47 // pred_fallthru
          _
      $region48: #{tpu_custom_call.1} parent=5 // pred_fallthru
        _
      %p405 = scmp.le.s32.totalorder 1, %s28
      %p406 = scmp.lt.s32.totalorder %s28, 3
      %p407 = pnand %p405, %p406
      %p408 = pneg %p407
      // Predicated region
      $region53: #{tpu_custom_call.1} parent=5 // pred_check
        _
      $region54: #{tpu_custom_call.1} parent=5 // pred_check_branch
        %410 = sbr.rel (%p407) target = $region56
      $region55: #{tpu_custom_call.1} parent=5 // pred_region
        %s411 = ssub.s32 %s28, 1
        %s412 = sand.u32 %s60, 1
        %s413 = scalar_lea.sflag [#allocation4], %s412
        %s414 = sand.u32 %s60, 1
        %s415 = smul.addr %s414, 4
        %s416 = scalar_lea.vmem [#allocation3], %s415
        // Predicated region
        $region57: #{tpu_custom_call.1} parent=55 // pred_check
          %p417 = pneg %p73
        $region58: #{tpu_custom_call.1} parent=55 // pred_check_branch
          %419 = sbr.rel (%p417) target = $region60
        $region59: #{tpu_custom_call.1} parent=55 // pred_region
          %420 = dma.done %s413, 64
        $region60: #{tpu_custom_call.1} parent=55 // pred_fallthru
          _
        // Predicated region
        $region61: #{tpu_custom_call.1} parent=55 // pred_check
          %p421 = pneg %p94
        $region62: #{tpu_custom_call.1} parent=55 // pred_check_branch
          %423 = sbr.rel (%p421) target = $region64
        $region63: #{tpu_custom_call.1} parent=55 // pred_region
          %424 = dma.done [#allocation7], 256
        $region64: #{tpu_custom_call.1} parent=55 // pred_fallthru
          _
        // Predicated region
        $region65: #{tpu_custom_call.1} parent=55 // pred_check
          %p425 = pneg %p143
        $region66: #{tpu_custom_call.1} parent=55 // pred_check_branch
          %427 = sbr.rel (%p425) target = $region68
        $region67: #{tpu_custom_call.1} parent=55 // pred_region
          %428 = dma.done [#allocation7], 256
        $region68: #{tpu_custom_call.1} parent=55 // pred_fallthru
          _
        // Predicated region
        $region69: #{tpu_custom_call.1} parent=55 // pred_check
          %p429 = pneg %p232
        $region70: #{tpu_custom_call.1} parent=55 // pred_check_branch
          %431 = sbr.rel (%p429) target = $region72
        $region71: #{tpu_custom_call.1} parent=55 // pred_region
          %432 = dma.done [#allocation10], 256
        $region72: #{tpu_custom_call.1} parent=55 // pred_fallthru
          _
        %s433 = sand.u32 %s60, 1
        %s434 = scalar_lea.sflag [#allocation4], %s433
        %s435 = sand.u32 %s60, 1
        %s436 = smul.addr %s435, 4
        %s437 = scalar_lea.vmem [#allocation3], %s436
        %p438 = pneg %p73
        %p439 = pneg %p70
        %p440 = pneg %p94
        %p441 = pneg %p91
        %p442 = pneg %p115
        %p443 = pneg %p112
        %p444 = pneg %p143
        %p445 = pneg %p140
        %p446 = scmp.lt.s32.totalorder %s39, 0
        %s447 = scalar_select %p446, %s39, 0
        %s448 = scalar_lea.vmem %s4, %s447
        %p449 = pneg %p169
        %p450 = pneg %p166
        %p451 = pneg %p190
        %p452 = pneg %p187
        %p453 = pneg %p211
        %p454 = pneg %p208
        %p455 = pneg %p232
        %p456 = pneg %p229
        %p457 = pneg %p253
        %p458 = pneg %p250
        %p459 = pneg %p281
        %p460 = pneg %p278
        %s461 = sand.u32 %s268, 1
        %s462 = scalar_lea.sflag [#allocation5], %s461
        %s463 = sand.u32 %s268, 1
        %s464 = smul.addr %s463, 8
        %s465 = scalar_lea.vmem [#allocation11], %s464
        %p466 = pneg %p307
        %p467 = pneg %p304
        %s468 = sand.u32 %s294, 1
        %s469 = scalar_lea.sflag [#allocation13], %s468
        %s470 = sand.u32 %s294, 1
        %s471 = smul.addr %s470, 8
        %s472 = scalar_lea.vmem [#allocation12], %s471
        %s473 = smul.u32 4, %s40
        %p474 = scmp.lt.s32.totalorder %s39, 0
        %s475 = scalar_select %p474, %s39, 0
        %s476 = scalar_lea.vmem %s4, %s475
        %p478 = scmp.eq.s32.totalorder %s39, 0
        %p479 = scmp.eq.s32.totalorder %s40, 0
        %p480 = pnand %p478, %p479
        %p481 = pneg %p480
        // Predicated region
        $region73: #{tpu_custom_call.1} parent=55 // pred_check
          _
        $region74: #{tpu_custom_call.1} parent=55 // pred_check_branch
          %483 = sbr.rel (%p480) target = $region76
        $region75: #{tpu_custom_call.1} parent=55 // pred_region
          %v484 = vld [vmem:[%s416] sm:$0xf]
          %v485 = vld [vmem:[#allocation6] sm:$0xf]
          %v486 = vld [vmem:[#allocation6 + $0x4] sm:$0xf]
          %v487 = vld [vmem:[#allocation6 + $0x8] sm:$0xf]
          %v488 = vld [vmem:[#allocation6 + $0xc] sm:$0xf]
          %v489 = vld [vmem:[%s2] sm:$0x1]
          %v491 = vlaneseq
          %v492 = vshrl.u32 %v491, 7
          %v493 = vsub.s32 0, %v492
          %v494 = vrot.slane %v489, %v493
          %v500 = vunpack.c.l.b16 %v485
          %v501 = vunpack.c.l.b16 %v486
          %v502 = vunpack.c.l.b16 %v487
          %v503 = vunpack.c.l.b16 %v488
          %v504 = vpack.c.b16 %v501, %v500
          %v505 = vpack.c.b16 %v503, %v502
          %vm508 = vcmask 261120
          %v510 = vsel %vm508, %v484, 0
          %512 = vmatprep.subr.bf16.mxu0 0
          %513 = vmatpush1.bf16.msra.mxu0 %v504
          %514 = vmatprep.subr.bf16.mxu0 0
          %515 = vmatpush1.bf16.msra.mxu0 %v505
          %516 = vmatprep.subr.bf16.mxu0 0
          %517 = vmatpush1.bf16.msra.mxu0 0
          %518 = vmatprep.subr.bf16.mxu0 0
          %519 = vmatpush1.bf16.msra.mxu0 0
          %520 = vmatprep.subr.bf16.mxu0 0
          %521 = vmatpush1.bf16.msra.mxu0 0
          %522 = vmatprep.subr.bf16.mxu0 0
          %523 = vmatpush1.bf16.msra.mxu0 0
          %524 = vmatprep.subr.bf16.mxu0 0
          %525 = vmatpush1.bf16.msra.mxu0 0
          %526 = vmatprep.subr.bf16.mxu0 0
          %527 = vmatpush1.bf16.msra.mxu0 0
          %528 = vmatprep.subr.bf16.mxu0 0
          %529 = vmatpush1.bf16.msra.mxu0 0
          %530 = vmatprep.subr.bf16.mxu0 0
          %531 = vmatpush1.bf16.msra.mxu0 0
          %532 = vmatprep.subr.bf16.mxu0 0
          %533 = vmatpush1.bf16.msra.mxu0 0
          %534 = vmatprep.subr.bf16.mxu0 0
          %535 = vmatpush1.bf16.msra.mxu0 0
          %536 = vmatprep.subr.bf16.mxu0 0
          %537 = vmatpush1.bf16.msra.mxu0 0
          %538 = vmatprep.subr.bf16.mxu0 0
          %539 = vmatpush1.bf16.msra.mxu0 0
          %540 = vmatprep.subr.bf16.mxu0 0
          %541 = vmatpush1.bf16.msra.mxu0 0
          %542 = vmatprep.subr.bf16.mxu0 0
          %543 = vmatpush1.bf16.msra.mxu0 0
          %544 = vmatprep.mubr.bf16.mxu0 0
          %545 = vmatmul.mubr.bf16.gmra.mrb[0].mxu0 %v510
          %v546 = vpop.f32.mrb[0].mxu0
          %v547 = vadd.f32 %v494, %v546
          %v548 = vpop.f32.mrb[0].mxu0
          %v549 = vpop.f32.mrb[0].mxu0
          %v550 = vpop.f32.mrb[0].mxu0
          %551 = vdwg.mxu0
          %v552 = vtanh.pop %v547
          %v553 = vpack.c.bf16 %v552, %v552
          %vm554 = vcmask 257024
          %555 = vst.msk [vmem:[#allocation2] sm:$0xf] %vm554, %v553
          %v556 = vld [vmem:[%s5] sm:$0xf]
          %v557 = vld [vmem:[%s5 + $0x4] sm:$0xf]
          %v558 = vld [vmem:[%s5 + $0x8] sm:$0xf]
          %v559 = vld [vmem:[%s5 + $0xc] sm:$0xf]
          %v560 = vld [vmem:[%s6] sm:$0x1]
          %v562 = vlaneseq
          %v563 = vshrl.u32 %v562, 7
          %v564 = vsub.s32 0, %v563
          %v565 = vrot.slane %v560, %v564
          %v571 = vunpack.c.l.b16 %v556
          %v572 = vunpack.c.l.b16 %v557
          %v573 = vunpack.c.l.b16 %v558
          %v574 = vunpack.c.l.b16 %v559
          %v575 = vpack.c.b16 %v572, %v571
          %v576 = vpack.c.b16 %v574, %v573
          %579 = vmatprep.subr.bf16.mxu0 0
          %580 = vmatpush1.bf16.msra.mxu0 %v575
          %581 = vmatprep.subr.bf16.mxu0 0
          %582 = vmatpush1.bf16.msra.mxu0 %v576
          %583 = vmatprep.subr.bf16.mxu0 0
          %584 = vmatpush1.bf16.msra.mxu0 0
          %585 = vmatprep.subr.bf16.mxu0 0
          %586 = vmatpush1.bf16.msra.mxu0 0
          %587 = vmatprep.subr.bf16.mxu0 0
          %588 = vmatpush1.bf16.msra.mxu0 0
          %589 = vmatprep.subr.bf16.mxu0 0
          %590 = vmatpush1.bf16.msra.mxu0 0
          %591 = vmatprep.subr.bf16.mxu0 0
          %592 = vmatpush1.bf16.msra.mxu0 0
          %593 = vmatprep.subr.bf16.mxu0 0
          %594 = vmatpush1.bf16.msra.mxu0 0
          %595 = vmatprep.subr.bf16.mxu0 0
          %596 = vmatpush1.bf16.msra.mxu0 0
          %597 = vmatprep.subr.bf16.mxu0 0
          %598 = vmatpush1.bf16.msra.mxu0 0
          %599 = vmatprep.subr.bf16.mxu0 0
          %600 = vmatpush1.bf16.msra.mxu0 0
          %601 = vmatprep.subr.bf16.mxu0 0
          %602 = vmatpush1.bf16.msra.mxu0 0
          %603 = vmatprep.subr.bf16.mxu0 0
          %604 = vmatpush1.bf16.msra.mxu0 0
          %605 = vmatprep.subr.bf16.mxu0 0
          %606 = vmatpush1.bf16.msra.mxu0 0
          %607 = vmatprep.subr.bf16.mxu0 0
          %608 = vmatpush1.bf16.msra.mxu0 0
          %609 = vmatprep.subr.bf16.mxu0 0
          %610 = vmatpush1.bf16.msra.mxu0 0
          %611 = vmatprep.mubr.bf16.mxu0 0
          %612 = vmatmul.mubr.bf16.gmra.mrb[0].mxu0 %v510
          %v613 = vpop.f32.mrb[0].mxu0
          %v614 = vadd.f32 %v565, %v613
          %v615 = vpop.f32.mrb[0].mxu0
          %v616 = vpop.f32.mrb[0].mxu0
          %v617 = vpop.f32.mrb[0].mxu0
          %618 = vdwg.mxu0
          %v619 = vtanh.pop %v614
          %v620 = vpack.c.bf16 %v619, %v619
          %v621 = vld [vmem:[#allocation9] sm:$0xf]
          %v622 = vld [vmem:[#allocation9 + $0x4] sm:$0xf]
          %v623 = vld [vmem:[#allocation9 + $0x8] sm:$0xf]
          %v624 = vld [vmem:[#allocation9 + $0xc] sm:$0xf]
          %v625 = vld [vmem:[%s8] sm:$0x1]
          %v627 = vlaneseq
          %v628 = vshrl.u32 %v627, 7
          %v629 = vsub.s32 0, %v628
          %v630 = vrot.slane %v625, %v629
          %v636 = vunpack.c.l.b16 %v621
          %v637 = vunpack.c.l.b16 %v622
          %v638 = vunpack.c.l.b16 %v623
          %v639 = vunpack.c.l.b16 %v624
          %v640 = vpack.c.b16 %v637, %v636
          %v641 = vpack.c.b16 %v639, %v638
          %v645 = vsel %vm508, %v620, 0
          %647 = vmatprep.subr.bf16.mxu0 0
          %648 = vmatpush1.bf16.msra.mxu0 %v640
          %649 = vmatprep.subr.bf16.mxu0 0
          %650 = vmatpush1.bf16.msra.mxu0 %v641
          %651 = vmatprep.subr.bf16.mxu0 0
          %652 = vmatpush1.bf16.msra.mxu0 0
          %653 = vmatprep.subr.bf16.mxu0 0
          %654 = vmatpush1.bf16.msra.mxu0 0
          %655 = vmatprep.subr.bf16.mxu0 0
          %656 = vmatpush1.bf16.msra.mxu0 0
          %657 = vmatprep.subr.bf16.mxu0 0
          %658 = vmatpush1.bf16.msra.mxu0 0
          %659 = vmatprep.subr.bf16.mxu0 0
          %660 = vmatpush1.bf16.msra.mxu0 0
          %661 = vmatprep.subr.bf16.mxu0 0
          %662 = vmatpush1.bf16.msra.mxu0 0
          %663 = vmatprep.subr.bf16.mxu0 0
          %664 = vmatpush1.bf16.msra.mxu0 0
          %665 = vmatprep.subr.bf16.mxu0 0
          %666 = vmatpush1.bf16.msra.mxu0 0
          %667 = vmatprep.subr.bf16.mxu0 0
          %668 = vmatpush1.bf16.msra.mxu0 0
          %669 = vmatprep.subr.bf16.mxu0 0
          %670 = vmatpush1.bf16.msra.mxu0 0
          %671 = vmatprep.subr.bf16.mxu0 0
          %672 = vmatpush1.bf16.msra.mxu0 0
          %673 = vmatprep.subr.bf16.mxu0 0
          %674 = vmatpush1.bf16.msra.mxu0 0
          %675 = vmatprep.subr.bf16.mxu0 0
          %676 = vmatpush1.bf16.msra.mxu0 0
          %677 = vmatprep.subr.bf16.mxu0 0
          %678 = vmatpush1.bf16.msra.mxu0 0
          %679 = vmatprep.mubr.bf16.mxu0 0
          %680 = vmatmul.mubr.bf16.gmra.mrb[0].mxu0 %v645
          %v681 = vpop.f32.mrb[0].mxu0
          %v682 = vadd.f32 %v630, %v681
          %v683 = vpop.f32.mrb[0].mxu0
          %v684 = vpop.f32.mrb[0].mxu0
          %v685 = vpop.f32.mrb[0].mxu0
          %686 = vdwg.mxu0
          %687 = vst [vmem:[%s472] sm:$0xff] %v682
        $region76: #{tpu_custom_call.1} parent=55 // pred_fallthru
          _
        %s688 = smul.addr %s40, 4
        %s689 = scalar_lea.vmem [#allocation2], %s688
        %v690 = vld [vmem:[%s689] sm:$0xf]
        %v691 = vld [vmem:[#allocation8] sm:$0xf]
        %v692 = vld [vmem:[#allocation8 + $0x4] sm:$0xf]
        %v693 = vld [vmem:[#allocation8 + $0x8] sm:$0xf]
        %v694 = vld [vmem:[#allocation8 + $0xc] sm:$0xf]
        %v699 = vunpack.c.l.b16 %v691
        %v700 = vunpack.c.l.b16 %v692
        %v701 = vunpack.c.l.b16 %v693
        %v702 = vunpack.c.l.b16 %v694
        %v703 = vpack.c.b16 %v700, %v699
        %v704 = vpack.c.b16 %v702, %v701
        %vm707 = vcmask 261120
        %v709 = vsel %vm707, %v690, 0
        %711 = vmatprep.subr.bf16.mxu0 0
        %712 = vmatpush1.bf16.msra.mxu0 %v703
        %713 = vmatprep.subr.bf16.mxu0 0
        %714 = vmatpush1.bf16.msra.mxu0 %v704
        %715 = vmatprep.subr.bf16.mxu0 0
        %716 = vmatpush1.bf16.msra.mxu0 0
        %717 = vmatprep.subr.bf16.mxu0 0
        %718 = vmatpush1.bf16.msra.mxu0 0
        %719 = vmatprep.subr.bf16.mxu0 0
        %720 = vmatpush1.bf16.msra.mxu0 0
        %721 = vmatprep.subr.bf16.mxu0 0
        %722 = vmatpush1.bf16.msra.mxu0 0
        %723 = vmatprep.subr.bf16.mxu0 0
        %724 = vmatpush1.bf16.msra.mxu0 0
        %725 = vmatprep.subr.bf16.mxu0 0
        %726 = vmatpush1.bf16.msra.mxu0 0
        %727 = vmatprep.subr.bf16.mxu0 0
        %728 = vmatpush1.bf16.msra.mxu0 0
        %729 = vmatprep.subr.bf16.mxu0 0
        %730 = vmatpush1.bf16.msra.mxu0 0
        %731 = vmatprep.subr.bf16.mxu0 0
        %732 = vmatpush1.bf16.msra.mxu0 0
        %733 = vmatprep.subr.bf16.mxu0 0
        %734 = vmatpush1.bf16.msra.mxu0 0
        %735 = vmatprep.subr.bf16.mxu0 0
        %736 = vmatpush1.bf16.msra.mxu0 0
        %737 = vmatprep.subr.bf16.mxu0 0
        %738 = vmatpush1.bf16.msra.mxu0 0
        %739 = vmatprep.subr.bf16.mxu0 0
        %740 = vmatpush1.bf16.msra.mxu0 0
        %741 = vmatprep.subr.bf16.mxu0 0
        %742 = vmatpush1.bf16.msra.mxu0 0
        %743 = vmatprep.mubr.bf16.mxu0 0
        %744 = vmatmul.mubr.bf16.gmra.mrb[0].mxu0 %v709
        %v745 = vpop.f32.mrb[0].mxu0
        %v746 = vadd.f32 0.0, %v745
        %v747 = vpop.f32.mrb[0].mxu0
        %v748 = vpop.f32.mrb[0].mxu0
        %v749 = vpop.f32.mrb[0].mxu0
        %750 = vdwg.mxu0
        // Predicated region
        $region77: #{tpu_custom_call.1} parent=55 // pred_check
          %p751 = pneg %p479
        $region78: #{tpu_custom_call.1} parent=55 // pred_check_branch
          %753 = sbr.rel (%p751) target = $region80
        $region79: #{tpu_custom_call.1} parent=55 // pred_region
          %vm754 = vcmask 523264
          %755 = vst.msk [vmem:[%s465] sm:$0xff] %vm754, %v746
        $region80: #{tpu_custom_call.1} parent=55 // pred_fallthru
          _
        %p756 = scmp.ne.s32.totalorder %s40, 0
        // Predicated region
        $region81: #{tpu_custom_call.1} parent=55 // pred_check
          %p757 = pneg %p756
        $region82: #{tpu_custom_call.1} parent=55 // pred_check_branch
          %759 = sbr.rel (%p757) target = $region84
        $region83: #{tpu_custom_call.1} parent=55 // pred_region
          %v760 = vld [vmem:[%s465] sm:$0xff]
          %v761 = vadd.f32 %v760, %v746
          %vm762 = vcmask 523264
          %763 = vst.msk [vmem:[%s465] sm:$0xff] %vm762, %v761
        $region84: #{tpu_custom_call.1} parent=55 // pred_fallthru
          _
        // Predicated region
        $region85: #{tpu_custom_call.1} parent=55 // pred_check
          %p764 = pneg %p479
        $region86: #{tpu_custom_call.1} parent=55 // pred_check_branch
          %766 = sbr.rel (%p764) target = $region88
        $region87: #{tpu_custom_call.1} parent=55 // pred_region
          %v767 = vld [vmem:[%s465] sm:$0xff]
          %v768 = vld [vmem:[%s476] sm:$0x1]
          %v770 = vlaneseq
          %v771 = vshrl.u32 %v770, 7
          %v772 = vsub.s32 0, %v771
          %v773 = vrot.slane %v768, %v772
          %v775 = vadd.f32 %v767, %v773
          %vm776 = vcmask 523264
          %777 = vst.msk [vmem:[%s465] sm:$0xff] %vm776, %v775
        $region88: #{tpu_custom_call.1} parent=55 // pred_fallthru
          _
        %s778 = sand.u32 %s268, 1
        %s779 = scalar_lea.sflag [#allocation5], %s778
        %s780 = sand.u32 %s268, 1
        %s781 = smul.addr %s780, 8
        %s782 = scalar_lea.vmem [#allocation11], %s781
        %s783 = sand.u32 %s294, 1
        %s784 = scalar_lea.sflag [#allocation13], %s783
        %s785 = sand.u32 %s294, 1
        %s786 = smul.addr %s785, 8
        %s787 = scalar_lea.vmem [#allocation12], %s786
        // Predicated region
        $region89: #{tpu_custom_call.1} parent=55 // pred_check
          %p788 = pneg %p278
        $region90: #{tpu_custom_call.1} parent=55 // pred_check_branch
          %790 = sbr.rel (%p788) target = $region92
        $region91: #{tpu_custom_call.1} parent=55 // pred_region
          %s792 = ssub.s32 128, 128
          %793 = vsyncadd %s779, %s792
          %s794 = sadd.s32 %s39, %s38
          %s795 = smul.addr %s794, 128
          %s796 = scalar_lea.hbm %s9, %s795
          %s798 = sshll.u32 %s782, 4
          %s799 = int_to_ptr.vmem [resolvable:$true] %s798
          %801 = dma.vmem_to_hbm [thread:$0]  %s799, 128, %s796, %s779
        $region92: #{tpu_custom_call.1} parent=55 // pred_fallthru
          _
        // Predicated region
        $region93: #{tpu_custom_call.1} parent=55 // pred_check
          %p802 = pneg %p304
        $region94: #{tpu_custom_call.1} parent=55 // pred_check_branch
          %804 = sbr.rel (%p802) target = $region96
        $region95: #{tpu_custom_call.1} parent=55 // pred_region
          %s806 = ssub.s32 128, 128
          %807 = vsyncadd %s784, %s806
          %s808 = smul.addr %s38, 128
          %s809 = scalar_lea.hbm %s10, %s808
          %s811 = sshll.u32 %s787, 4
          %s812 = int_to_ptr.vmem [resolvable:$true] %s811
          %814 = dma.vmem_to_hbm [thread:$0]  %s812, 128, %s809, %s784
        $region96: #{tpu_custom_call.1} parent=55 // pred_fallthru
          _
      $region56: #{tpu_custom_call.1} parent=5 // pred_fallthru
        _
      %p815 = scmp.le.s32.totalorder 2, %s28
      // Predicated region
      $region97: #{tpu_custom_call.1} parent=5 // pred_check
        %p816 = pneg %p815
      $region98: #{tpu_custom_call.1} parent=5 // pred_check_branch
        %818 = sbr.rel (%p816) target = $region100
      $region99: #{tpu_custom_call.1} parent=5 // pred_region
        %s819 = ssub.s32 %s28, 2
        // Predicated region
        $region101: #{tpu_custom_call.1} parent=99 // pred_check
          %p820 = pneg %p284
        $region102: #{tpu_custom_call.1} parent=99 // pred_check_branch
          %822 = sbr.rel (%p820) target = $region104
        $region103: #{tpu_custom_call.1} parent=99 // pred_region
          %s823 = sand.u32 %s269, 1
          %s824 = scalar_lea.sflag [#allocation5], %s823
          %s825 = sand.u32 %s269, 1
          %s826 = smul.addr %s825, 8
          %s827 = scalar_lea.vmem [#allocation11], %s826
          %828 = dma.done %s824, 128
        $region104: #{tpu_custom_call.1} parent=99 // pred_fallthru
          _
        // Predicated region
        $region105: #{tpu_custom_call.1} parent=99 // pred_check
          %p829 = pneg %p310
        $region106: #{tpu_custom_call.1} parent=99 // pred_check_branch
          %831 = sbr.rel (%p829) target = $region108
        $region107: #{tpu_custom_call.1} parent=99 // pred_region
          %s832 = sand.u32 %s295, 1
          %s833 = scalar_lea.sflag [#allocation13], %s832
          %s834 = sand.u32 %s295, 1
          %s835 = smul.addr %s834, 8
          %s836 = scalar_lea.vmem [#allocation12], %s835
          %837 = dma.done %s833, 128
        $region108: #{tpu_custom_call.1} parent=99 // pred_fallthru
          _
      $region100: #{tpu_custom_call.1} parent=5 // pred_fallthru
        _
    $region6: #{tpu_custom_call.1} parent=1 // loop_footer
      %s32 = sadd.s32 1, %s28
    $region7: #{tpu_custom_call.1} parent=1 // loop_footer_branch
      %27 = sbr.rel target = $region3
    $region8: #{tpu_custom_call.1} parent=1 // loop_exit
      _
    %838 = vsyncpa [#allocation4], 1
    %s839 = scalar_lea.sflag [#allocation4], 1
    %840 = vsyncpa %s839, 1
    %841 = vsyncpa [#allocation7], 1
    %842 = vsyncpa [#allocation10], 1
    %843 = vsyncpa [#allocation5], 1
    %s844 = scalar_lea.sflag [#allocation5], 1
    %845 = vsyncpa %s844, 1
    %846 = vsyncpa [#allocation13], 1
    %s847 = scalar_lea.sflag [#allocation13], 1
    %848 = vsyncpa %s847, 1

</llo_original>
